<compile_context>
chip_gen: v7x
topology: tpu7x:2x2x1
jax: 0.10.0
libtpu: 0.0.40
codegen_flags: <defaults>
</compile_context>

<pallas_src>
import functools

import jax
import jax.numpy as jnp
from jax.experimental import pallas as pl
from jax.experimental.pallas import tpu as pltpu


def _ceil_to(x: int, m: int) -> int:
    return ((x + m - 1) // m) * m


# ---------------------------------------------------------------------------
# Linear: h = x @ W^T + b, emitted as an exact hi/lo bf16 split of f32 h.
# ---------------------------------------------------------------------------
def _linear_kernel(x_ref, wt_ref, b_ref, hi_ref, lo_ref):
    h = (
        jnp.dot(x_ref[...], wt_ref[...], preferred_element_type=jnp.float32)
        + b_ref[...]
    )
    hi = h.astype(jnp.bfloat16)
    lo = (h - hi.astype(jnp.float32)).astype(jnp.bfloat16)  # exact residual split
    hi_ref[...] = hi
    lo_ref[...] = lo


# ---------------------------------------------------------------------------
# Mean aggregation: out = rownorm(A) @ h, tiled over (row, k) blocks.
# ---------------------------------------------------------------------------
def _aggregate_kernel(a_ref, hi_ref, lo_ref, o_ref, *scratch,
                      tk, cout, ones_col, resident):
    k = pl.program_id(1)
    nk = pl.num_programs(1)

    @pl.when(k == 0)
    def _init():
        o_ref[...] = jnp.zeros_like(o_ref)
        if not ones_col:
            scratch[0][...] = jnp.zeros_like(scratch[0])

    a = a_ref[...]  # bf16, entries exactly 0/1; fed straight into the MXU.

    if resident:
        # h is fully VMEM-resident; slice the k-th contraction window.
        start = pl.multiple_of(k * tk, tk)
        h_hi = hi_ref[pl.ds(start, tk), :]
        h_lo = lo_ref[pl.ds(start, tk), :]
    else:
        h_hi = hi_ref[...]
        h_lo = lo_ref[...]

    # Two bf16 MXU passes with f32 accumulation; hi+lo reconstructs the f32 h
    # to ~2^-18 relative, so the result matches the f32 reference at 1e-5.
    o_ref[...] += (
        jnp.dot(a, h_hi, preferred_element_type=jnp.float32)
        + jnp.dot(a, h_lo, preferred_element_type=jnp.float32)
    )

    if not ones_col:
        # Fallback (cout % 128 == 0, no spare lane): XLU row-sum in f32.
        scratch[0][...] += jnp.sum(a.astype(jnp.float32), axis=-1, keepdims=True)

    @pl.when(k == nk - 1)
    def _finalize():
        acc = o_ref[...]
        if ones_col:
            # Degree rides along in padded lane `cout` of the same matmul.
            # Extract via masked lane-reduce (avoids an unaligned lane slice);
            # runs once per row block only.
            lane = jax.lax.broadcasted_iota(jnp.int32, acc.shape, 1)
            deg = jnp.sum(jnp.where(lane == cout, acc, 0.0), axis=-1,
                          keepdims=True)
        else:
            deg = scratch[0][...]
        inv_deg = jnp.where(deg > 0.0, 1.0 / deg, 0.0)  # exact divide, epilogue only
        o_ref[...] = acc * inv_deg


# ---------------------------------------------------------------------------
# Adjacency prep: bf16 cast + tile padding.  Amortise per graph.
# ---------------------------------------------------------------------------
def _prepare_adjacency(adj, n_rows, n_cols):
    # TODO(synk): cache this per graph and reuse across layers/steps so the
    # staging traffic is not paid on every forward call.
    a_p = jnp.zeros((n_rows, n_cols), jnp.bfloat16)
    return a_p.at[: adj.shape[0], : adj.shape[1]].set(adj.astype(jnp.bfloat16))


@functools.partial(
    jax.jit,
    static_argnames=("n", "tm", "tk", "resident", "ones_col", "vmem_limit"),
)
def _forward(a_p, x, weight, bias, *, n, tm, tk, resident, ones_col, vmem_limit):
    n_rows, n_cols = a_p.shape
    cin = x.shape[1]
    cout = weight.shape[0]
    cout_p = _ceil_to(cout, 128)

    # Host-side (tiny) padding of the linear-layer operands.
    x_p = jnp.zeros((n_cols, cin), jnp.float32).at[:n, :].set(x.astype(jnp.float32))
    wt_p = (
        jnp.zeros((cin, cout_p), jnp.float32)
        .at[:, :cout]
        .set(weight.T.astype(jnp.float32))
    )
    b_p = (
        jnp.zeros((1, cout_p), jnp.float32)
        .at[:, :cout]
        .set(jnp.reshape(bias, (1, -1)).astype(jnp.float32))
    )
    if ones_col:
        # Spare padded lane: wt column is zero, bias 1.0 -> h[:, cout] == 1.0,
        # so A @ h accumulates the row degree in that lane for free.
        b_p = b_p.at[0, cout].set(1.0)

    # ---- step 1: h = x @ W^T + b, stored as hi/lo bf16 (computed once) ------
    h_hi, h_lo = pl.pallas_call(
        _linear_kernel,
        out_shape=(
            jax.ShapeDtypeStruct((n_cols, cout_p), jnp.bfloat16),
            jax.ShapeDtypeStruct((n_cols, cout_p), jnp.bfloat16),
        ),
        grid_spec=pltpu.PrefetchScalarGridSpec(
            num_scalar_prefetch=0,
            grid=(n_cols // tk,),
            in_specs=[
                pl.BlockSpec((tk, cin), lambda i: (i, 0)),
                pl.BlockSpec((cin, cout_p), lambda i: (0, 0)),
                pl.BlockSpec((1, cout_p), lambda i: (0, 0)),
            ],
            out_specs=[
                pl.BlockSpec((tk, cout_p), lambda i: (i, 0)),
                pl.BlockSpec((tk, cout_p), lambda i: (i, 0)),
            ],
        ),
        compiler_params=pltpu.CompilerParams(
            dimension_semantics=("parallel",),
            vmem_limit_bytes=vmem_limit,
        ),
    )(x_p, wt_p, b_p)

    # ---- step 2: out = rownorm(A) @ h ---------------------------------------
    if resident:
        # Constant block index -> h fetched into VMEM once for the whole grid.
        h_spec = pl.BlockSpec((n_cols, cout_p), lambda i, k: (0, 0))
    else:
        h_spec = pl.BlockSpec((tk, cout_p), lambda i, k: (k, 0))

    kernel = functools.partial(
        _aggregate_kernel, tk=tk, cout=cout, ones_col=ones_col, resident=resident
    )
    scratch_shapes = [] if ones_col else [pltpu.VMEM((tm, 1), jnp.float32)]

    out_p = pl.pallas_call(
        kernel,
        out_shape=jax.ShapeDtypeStruct((n_rows, cout_p), jnp.float32),
        grid_spec=pltpu.PrefetchScalarGridSpec(
            num_scalar_prefetch=0,
            grid=(n_rows // tm, n_cols // tk),  # reduction axis last
            in_specs=[
                # NOTE: sweep pipeline_mode=pl.Buffered(3) on this A spec only
                # if xprof shows exposed DMA with the enlarged tiles.
                pl.BlockSpec((tm, tk), lambda i, k: (i, k)),
                h_spec,
                h_spec,
            ],
            out_specs=pl.BlockSpec((tm, cout_p), lambda i, k: (i, 0)),
            scratch_shapes=scratch_shapes,
        ),
        compiler_params=pltpu.CompilerParams(
            dimension_semantics=("parallel", "arbitrary"),
            vmem_limit_bytes=vmem_limit,
        ),
    )(a_p, h_hi, h_lo)

    return out_p[:n, :cout]


def mean_aggregator(adj, x, weight, bias, *, tm=512, tk=1024):
    """Forward pass of cogdl MeanAggregator.

    adj:    (N, N)      dense adjacency (row i = out-edges of node i)
    x:      (N, Cin)    node features
    weight: (Cout, Cin) nn.Linear weight
    bias:   (1, Cout)   nn.Linear bias
    returns (N, Cout) float32
    """
    n = x.shape[0]
    cout = weight.shape[0]
    cout_p = _ceil_to(cout, 128)
    ones_col = (cout % 128) != 0  # spare padded lane available for the degree

    # ---- VMEM-budget-aware tile selection (v5e/v6e: 128 MiB, v7x: 64 MiB) ---
    try:
        vmem_cap = int(pltpu.get_tpu_info().vmem_capacity_bytes)
    except Exception:
        vmem_cap = 64 * 1024 * 1024
    budget = int(vmem_cap * 0.6)

    tm = min(tm, _ceil_to(n, 16))
    if n >= 512:
        # Keep >= 2 row blocks so the "parallel" axis can shard across cores.
        tm = min(tm, _ceil_to(-(-n // 2), 256))
    tk = min(tk, _ceil_to(n, 128))

    def h_resident_ok(tk_):
        n_cols_ = _ceil_to(n, tk_)
        return 2 * (2 * n_cols_ * cout_p * 2) <= min(budget // 2, 16 * 2**20)

    def vmem_need(tm_, tk_, res_):
        n_cols_ = _ceil_to(n, tk_)
        a_b = 2 * tm_ * tk_ * 2                      # double-buffered bf16 A tile
        o_b = 2 * tm_ * cout_p * 4                   # double-buffered f32 output
        d_b = 0 if ones_col else tm_ * 128 * 4       # degree scratch (lane-padded)
        h_b = (2 * (2 * n_cols_ * cout_p * 2) if res_
               else 2 * (2 * tk_ * cout_p * 2))      # hi+lo bf16
        return a_b + o_b + d_b + h_b

    resident = h_resident_ok(tk)
    while vmem_need(tm, tk, resident) > budget:
        if tk > 256:
            tk = (tk // 2) // 128 * 128
        elif tm > 64:
            tm = (tm // 2) // 16 * 16
        else:
            break
        resident = h_resident_ok(tk)

    n_rows = _ceil_to(n, tm)
    n_cols = _ceil_to(n, tk)
    vmem_limit = int(
        min(0.85 * vmem_cap, max(2 * vmem_need(tm, tk, resident), 32 * 2**20))
    )

    a_p = _prepare_adjacency(adj, n_rows, n_cols)
    return _forward(
        a_p, x, weight, bias,
        n=n, tm=tm, tk=tk, resident=resident, ones_col=ones_col,
        vmem_limit=vmem_limit,
    )


def reference(adj, x, weight, bias):
    h = x @ weight.T + bias
    deg = adj.sum(-1, keepdims=True)
    inv = jnp.where(deg > 0, 1.0 / deg, 0.0)
    return (adj @ h) * inv


if __name__ == "__main__":
    key = jax.random.PRNGKey(0)
    k_x, k_w, k_b, k_a = jax.random.split(key, 4)

    N = 16           # number of graph nodes
    IN_CH = 32       # in_channels
    OUT_CH = 32      # out_channels

    x = jax.random.normal(k_x, (N, IN_CH), dtype=jnp.float32)

    # Deterministic parameter init (synthetic, matches nn.Linear shapes).
    bound = 1.0 / jnp.sqrt(jnp.float32(IN_CH))
    weight = jax.random.uniform(k_w, (OUT_CH, IN_CH), jnp.float32, -bound, bound)
    bias = jax.random.uniform(k_b, (1, OUT_CH), jnp.float32, -bound, bound)

    # Random dense adjacency with self-loops (every row has degree >= 1).
    adj = jax.random.bernoulli(k_a, 0.3, (N, N)).astype(jnp.float32)
    adj = jnp.maximum(adj, jnp.eye(N, dtype=jnp.float32))

    out = mean_aggregator(adj, x, weight, bias)
    out = jax.block_until_ready(out)

    ref = reference(adj, x, weight, bias)
    assert out.shape == (N, OUT_CH)
    assert jnp.allclose(out, ref, atol=1e-5, rtol=1e-5), float(
        jnp.max(jnp.abs(out - ref))
    )

    print("KERNEL_OK")
</pallas_src>

<mosaic_0001>
module attributes {stable_mosaic.version = 11 : i64} {
  func.func @_linear_kernel(%arg0: i32, %arg1: memref<128x32xf32, #tpu.memory_space<vmem>>, %arg2: memref<32x128xf32, #tpu.memory_space<vmem>>, %arg3: memref<1x128xf32, #tpu.memory_space<vmem>>, %arg4: memref<128x128xbf16, #tpu.memory_space<vmem>>, %arg5: memref<128x128xbf16, #tpu.memory_space<vmem>>) attributes {dimension_semantics = [#tpu.dimension_semantics<parallel>], iteration_bounds = array<i64: 1>, scalar_prefetch = 0 : i64, scratch_operands = 0 : i64, tpu.core_type = #tpu.core_type<tc>, window_params = [{transform_indices = @transform_0, window_bounds = array<i64: 128, 32>}, {pipeline_mode = #tpu.pipeline_mode<synchronous>, transform_indices = @transform_1, window_bounds = array<i64: 32, 128>}, {pipeline_mode = #tpu.pipeline_mode<synchronous>, transform_indices = @transform_2, window_bounds = array<i64: 1, 128>}, {transform_indices = @transform_3, window_bounds = array<i64: 128, 128>}, {transform_indices = @transform_4, window_bounds = array<i64: 128, 128>}]} {
    %c0 = arith.constant 0 : index
    %c0_0 = arith.constant 0 : index
    %0 = vector.load %arg1[%c0, %c0_0] : memref<128x32xf32, #tpu.memory_space<vmem>>, vector<128x32xf32>
    %c0_1 = arith.constant 0 : index
    %c0_2 = arith.constant 0 : index
    %1 = vector.load %arg2[%c0_1, %c0_2] : memref<32x128xf32, #tpu.memory_space<vmem>>, vector<32x128xf32>
    %cst = arith.constant dense<0.000000e+00> : vector<128x128xf32>
    %2 = tpu.matmul %0, %1, %cst {dimension_numbers = #tpu.dot_dimension_numbers<[1], [0], [0], [1], [0, 0, 1, 1], [], []>} : vector<128x32xf32>, vector<32x128xf32>, vector<128x128xf32> -> vector<128x128xf32>
    %c0_3 = arith.constant 0 : index
    %c0_4 = arith.constant 0 : index
    %3 = vector.load %arg3[%c0_3, %c0_4] : memref<1x128xf32, #tpu.memory_space<vmem>>, vector<1x128xf32>
    %4 = vector.broadcast %3 : vector<1x128xf32> to vector<128x128xf32>
    %5 = arith.addf %2, %4 : vector<128x128xf32>
    %6 = arith.truncf %5 : vector<128x128xf32> to vector<128x128xbf16>
    %7 = arith.extf %6 : vector<128x128xbf16> to vector<128x128xf32>
    %8 = arith.subf %5, %7 : vector<128x128xf32>
    %9 = arith.truncf %8 : vector<128x128xf32> to vector<128x128xbf16>
    %c0_5 = arith.constant 0 : index
    %c0_6 = arith.constant 0 : index
    %10 = vector.load %arg4[%c0_5, %c0_6] : memref<128x128xbf16, #tpu.memory_space<vmem>>, vector<128x128xbf16>
    tpu.vector_store %arg4[%c0_5, %c0_6], %6 {strides = array<i32>} : memref<128x128xbf16, #tpu.memory_space<vmem>>, vector<128x128xbf16>,
    %c0_7 = arith.constant 0 : index
    %c0_8 = arith.constant 0 : index
    %11 = vector.load %arg5[%c0_7, %c0_8] : memref<128x128xbf16, #tpu.memory_space<vmem>>, vector<128x128xbf16>
    tpu.vector_store %arg5[%c0_7, %c0_8], %9 {strides = array<i32>} : memref<128x128xbf16, #tpu.memory_space<vmem>>, vector<128x128xbf16>,
    return
  }
  func.func @transform_0(%arg0: i32) -> (i32, i32) {
    %c0_i32 = arith.constant 0 : i32
    %c0_i32_0 = arith.constant 0 : i32
    return %arg0, %c0_i32 : i32, i32
  }
  func.func @transform_1(%arg0: i32) -> (i32, i32) {
    %c0_i32 = arith.constant 0 : i32
    %c0_i32_0 = arith.constant 0 : i32
    %c0_i32_1 = arith.constant 0 : i32
    return %c0_i32, %c0_i32_0 : i32, i32
  }
  func.func @transform_2(%arg0: i32) -> (i32, i32) {
    %c0_i32 = arith.constant 0 : i32
    %c0_i32_0 = arith.constant 0 : i32
    %c0_i32_1 = arith.constant 0 : i32
    return %c0_i32, %c0_i32_0 : i32, i32
  }
  func.func @transform_3(%arg0: i32) -> (i32, i32) {
    %c0_i32 = arith.constant 0 : i32
    %c0_i32_0 = arith.constant 0 : i32
    return %arg0, %c0_i32 : i32, i32
  }
  func.func @transform_4(%arg0: i32) -> (i32, i32) {
    %c0_i32 = arith.constant 0 : i32
    %c0_i32_0 = arith.constant 0 : i32
    return %arg0, %c0_i32 : i32, i32
  }
}

module attributes {stable_mosaic.version = 11 : i64} {
  func.func @_aggregate_kernel(%arg0: i32, %arg1: i32, %arg2: memref<16x128xbf16, #tpu.memory_space<vmem>>, %arg3: memref<128x128xbf16, #tpu.memory_space<vmem>>, %arg4: memref<128x128xbf16, #tpu.memory_space<vmem>>, %arg5: memref<16x128xf32, #tpu.memory_space<vmem>>) attributes {dimension_semantics = [#tpu.dimension_semantics<parallel>, #tpu.dimension_semantics<arbitrary>], iteration_bounds = array<i64: 1, 1>, scalar_prefetch = 0 : i64, scratch_operands = 0 : i64, tpu.core_type = #tpu.core_type<tc>, window_params = [{transform_indices = @transform_0, window_bounds = array<i64: 16, 128>}, {pipeline_mode = #tpu.pipeline_mode<synchronous>, transform_indices = @transform_1, window_bounds = array<i64: 128, 128>}, {pipeline_mode = #tpu.pipeline_mode<synchronous>, transform_indices = @transform_2, window_bounds = array<i64: 128, 128>}, {transform_indices = @transform_3, window_bounds = array<i64: 16, 128>}]} {
    %c0_i32 = arith.constant 0 : i32
    %0 = arith.cmpi eq, %arg1, %c0_i32 : i32
    %1 = arith.extui %0 : i1 to i32
    %c0_i32_0 = arith.constant 0 : i32
    %2 = arith.cmpi ne, %1, %c0_i32_0 : i32
    scf.if %2 {
      %cst_11 = arith.constant 0.000000e+00 : f32
      %19 = vector.broadcast %cst_11 : f32 to vector<16x128xf32>
      %c0_12 = arith.constant 0 : index
      %c0_13 = arith.constant 0 : index
      %20 = vector.load %arg5[%c0_12, %c0_13] : memref<16x128xf32, #tpu.memory_space<vmem>>, vector<16x128xf32>
      tpu.vector_store %arg5[%c0_12, %c0_13], %19 {strides = array<i32>} : memref<16x128xf32, #tpu.memory_space<vmem>>, vector<16x128xf32>,
    } else {
    }
    %c0 = arith.constant 0 : index
    %c0_1 = arith.constant 0 : index
    %3 = vector.load %arg2[%c0, %c0_1] : memref<16x128xbf16, #tpu.memory_space<vmem>>, vector<16x128xbf16>
    %c128_i32 = arith.constant 128 : i32
    %4 = arith.muli %arg1, %c128_i32 : i32
    %5 = tpu.assume_multiple %4, 128 : i32
    %6 = arith.index_cast %5 : i32 to index
    %c0_2 = arith.constant 0 : index
    %7 = vector.load %arg3[%6, %c0_2] : memref<128x128xbf16, #tpu.memory_space<vmem>>, vector<128x128xbf16>
    %8 = arith.index_cast %5 : i32 to index
    %c0_3 = arith.constant 0 : index
    %9 = vector.load %arg4[%8, %c0_3] : memref<128x128xbf16, #tpu.memory_space<vmem>>, vector<128x128xbf16>
    %c0_4 = arith.constant 0 : index
    %c0_5 = arith.constant 0 : index
    %10 = vector.load %arg5[%c0_4, %c0_5] : memref<16x128xf32, #tpu.memory_space<vmem>>, vector<16x128xf32>
    %cst = arith.constant dense<0.000000e+00> : vector<16x128xf32>
    %11 = tpu.matmul %3, %7, %cst {dimension_numbers = #tpu.dot_dimension_numbers<[1], [0], [0], [1], [0, 0, 1, 1], [], []>} : vector<16x128xbf16>, vector<128x128xbf16>, vector<16x128xf32> -> vector<16x128xf32>
    %cst_6 = arith.constant dense<0.000000e+00> : vector<16x128xf32>
    %12 = tpu.matmul %3, %9, %cst_6 {dimension_numbers = #tpu.dot_dimension_numbers<[1], [0], [0], [1], [0, 0, 1, 1], [], []>} : vector<16x128xbf16>, vector<128x128xbf16>, vector<16x128xf32> -> vector<16x128xf32>
    %13 = arith.addf %11, %12 : vector<16x128xf32>
    %14 = arith.addf %10, %13 : vector<16x128xf32>
    %c0_7 = arith.constant 0 : index
    %c0_8 = arith.constant 0 : index
    %15 = vector.load %arg5[%c0_7, %c0_8] : memref<16x128xf32, #tpu.memory_space<vmem>>, vector<16x128xf32>
    tpu.vector_store %arg5[%c0_7, %c0_8], %14 {strides = array<i32>} : memref<16x128xf32, #tpu.memory_space<vmem>>, vector<16x128xf32>,
    %c0_i32_9 = arith.constant 0 : i32
    %16 = arith.cmpi eq, %arg1, %c0_i32_9 : i32
    %17 = arith.extui %16 : i1 to i32
    %c0_i32_10 = arith.constant 0 : i32
    %18 = arith.cmpi ne, %17, %c0_i32_10 : i32
    scf.if %18 {
      %c0_11 = arith.constant 0 : index
      %c0_12 = arith.constant 0 : index
      %19 = vector.load %arg5[%c0_11, %c0_12] : memref<16x128xf32, #tpu.memory_space<vmem>>, vector<16x128xf32>
      %20 = tpu.iota {dimensions = array<i32: 1>} : vector<16x128xi32>
      %c32_i32 = arith.constant 32 : i32
      %21 = vector.broadcast %c32_i32 : i32 to vector<16x128xi32>
      %22 = arith.cmpi eq, %20, %21 : vector<16x128xi32>
      %cst_13 = arith.constant 0.000000e+00 : f32
      %23 = vector.broadcast %cst_13 : f32 to vector<16x128xf32>
      %24 = arith.select %22, %19, %23 : vector<16x128xi1>, vector<16x128xf32>
      %cst_14 = arith.constant dense<0.000000e+00> : vector<16xf32>
      %25 = vector.multi_reduction <add>, %24, %cst_14 [1] : vector<16x128xf32> to vector<16xf32>
      %26 = vector.shape_cast %25 : vector<16xf32> to vector<16x1xf32>
      %cst_15 = arith.constant 0.000000e+00 : f32
      %27 = vector.broadcast %cst_15 : f32 to vector<16x1xf32>
      %28 = arith.cmpf ogt, %26, %27 : vector<16x1xf32>
      %cst_16 = arith.constant 1.000000e+00 : f32
      %29 = vector.broadcast %cst_16 : f32 to vector<16x1xf32>
      %30 = arith.divf %29, %26 : vector<16x1xf32>
      %cst_17 = arith.constant 0.000000e+00 : f32
      %31 = vector.broadcast %cst_17 : f32 to vector<16x1xf32>
      %32 = arith.select %28, %30, %31 : vector<16x1xi1>, vector<16x1xf32>
      %33 = vector.broadcast %32 : vector<16x1xf32> to vector<16x128xf32>
      %34 = arith.mulf %19, %33 : vector<16x128xf32>
      %c0_18 = arith.constant 0 : index
      %c0_19 = arith.constant 0 : index
      %35 = vector.load %arg5[%c0_18, %c0_19] : memref<16x128xf32, #tpu.memory_space<vmem>>, vector<16x128xf32>
      tpu.vector_store %arg5[%c0_18, %c0_19], %34 {strides = array<i32>} : memref<16x128xf32, #tpu.memory_space<vmem>>, vector<16x128xf32>,
    } else {
    }
    return
  }
  func.func @transform_0(%arg0: i32, %arg1: i32) -> (i32, i32) {
    %c0_i32 = arith.constant 0 : i32
    return %arg0, %arg1 : i32, i32
  }
  func.func @transform_1(%arg0: i32, %arg1: i32) -> (i32, i32) {
    %c0_i32 = arith.constant 0 : i32
    %c0_i32_0 = arith.constant 0 : i32
    %c0_i32_1 = arith.constant 0 : i32
    return %c0_i32, %c0_i32_0 : i32, i32
  }
  func.func @transform_2(%arg0: i32, %arg1: i32) -> (i32, i32) {
    %c0_i32 = arith.constant 0 : i32
    %c0_i32_0 = arith.constant 0 : i32
    %c0_i32_1 = arith.constant 0 : i32
    return %c0_i32, %c0_i32_0 : i32, i32
  }
  func.func @transform_3(%arg0: i32, %arg1: i32) -> (i32, i32) {
    %c0_i32 = arith.constant 0 : i32
    %c0_i32_0 = arith.constant 0 : i32
    return %arg0, %c0_i32 : i32, i32
  }
}

</mosaic_0001>

<llo_original>
// kernel: _forward.2
$region0: #{_forward.2}
  #allocation0 [shape = 'u32[]', space=smem, size = 0x4, offset = 0x4, fixed_abs, tag = 'smem constant byte address 0x4 - core index']
  #allocation1 [shape = 'u32[144,128]{1,0:T(1,128)}', space=vmem, size = 0x12000, scoped, tag = 'internal scratch']
  %s0 = inlined_call_operand.vmem [shape: f32[128,32], index: 0, kind: input, shape index: {}]
  %s1 = inlined_call_operand.vmem [shape: f32[32,128], index: 1, kind: input, shape index: {}]
  %s2 = inlined_call_operand.vmem [shape: f32[1,128], index: 2, kind: input, shape index: {}]
  %s3 = inlined_call_operand.vmem [shape: bf16[128,128], index: 3, kind: output, shape index: {0}]
  %s4 = inlined_call_operand.vmem [shape: bf16[128,128], index: 4, kind: output, shape index: {1}]
  %5 = xla_tuple %s3, %s4
  %s6 = sld [smem:[#allocation0]]
  $region30: #{_forward.2} parent=0
    _
  %s8 = ssub.s32 1, %s6
  %s9 = scalar_select 0, %s8, %s6
  // Predicated region
  $region2: #{_forward.2} parent=0 // pred_check
    _
  $region3: #{_forward.2} parent=0 // pred_check_branch
    %11 = sbr.rel (0) target = $region5
  $region4: #{_forward.2} parent=0 // pred_region
    _
  $region5: #{_forward.2} parent=0 // pred_fallthru
    _
  // Predicated region
  $region6: #{_forward.2} parent=0 // pred_check
    _
  $region7: #{_forward.2} parent=0 // pred_check_branch
    %13 = sbr.rel (0) target = $region9
  $region8: #{_forward.2} parent=0 // pred_region
    _
  $region9: #{_forward.2} parent=0 // pred_fallthru
    _
  // Predicated region
  $region10: #{_forward.2} parent=0 // pred_check
    _
  $region11: #{_forward.2} parent=0 // pred_check_branch
    %15 = sbr.rel (0) target = $region13
  $region12: #{_forward.2} parent=0 // pred_region
    _
  $region13: #{_forward.2} parent=0 // pred_fallthru
    _
  %v16 = vld [vmem:[%s0] sm:$0xff]
  %v17 = vld [vmem:[%s0 + $0x8] sm:$0xff]
  %v18 = vld [vmem:[%s0 + $0x10] sm:$0xff]
  %v19 = vld [vmem:[%s0 + $0x18] sm:$0xff]
  %v20 = vld [vmem:[%s0 + $0x20] sm:$0xff]
  %v21 = vld [vmem:[%s0 + $0x28] sm:$0xff]
  %v22 = vld [vmem:[%s0 + $0x30] sm:$0xff]
  %v23 = vld [vmem:[%s0 + $0x38] sm:$0xff]
  %v24 = vld [vmem:[%s0 + $0x40] sm:$0xff]
  %v25 = vld [vmem:[%s0 + $0x48] sm:$0xff]
  %v26 = vld [vmem:[%s0 + $0x50] sm:$0xff]
  %v27 = vld [vmem:[%s0 + $0x58] sm:$0xff]
  %v28 = vld [vmem:[%s0 + $0x60] sm:$0xff]
  %v29 = vld [vmem:[%s0 + $0x68] sm:$0xff]
  %v30 = vld [vmem:[%s0 + $0x70] sm:$0xff]
  %v31 = vld [vmem:[%s0 + $0x78] sm:$0xff]
  %v32 = vld [vmem:[%s1] sm:$0xff]
  %v33 = vld [vmem:[%s1 + $0x8] sm:$0xff]
  %v34 = vld [vmem:[%s1 + $0x10] sm:$0xff]
  %v35 = vld [vmem:[%s1 + $0x18] sm:$0xff]
  %v36 = vld [vmem:[%s2] sm:$0x1]
  %v38 = vlaneseq
  %v39 = vshrl.u32 %v38, 7
  %v40 = vsub.s32 0, %v39
  %v41 = vrot.slane %v36, %v40
  %vm43 = vcmask 261120
  %v45 = vsel %vm43, %v16, 0
  %v48 = vsel %vm43, %v17, 0
  %v51 = vsel %vm43, %v18, 0
  %v54 = vsel %vm43, %v19, 0
  %v57 = vsel %vm43, %v20, 0
  %v60 = vsel %vm43, %v21, 0
  %v63 = vsel %vm43, %v22, 0
  %v66 = vsel %vm43, %v23, 0
  %v69 = vsel %vm43, %v24, 0
  %v72 = vsel %vm43, %v25, 0
  %v75 = vsel %vm43, %v26, 0
  %v78 = vsel %vm43, %v27, 0
  %v81 = vsel %vm43, %v28, 0
  %v84 = vsel %vm43, %v29, 0
  %v87 = vsel %vm43, %v30, 0
  %v90 = vsel %vm43, %v31, 0
  %92 = vmatprep.subr.mxu0 0.0
  %93 = vmatpush1.msra.mxu0 %v32
  %94 = vmatprep.subr.mxu0 0.0
  %95 = vmatpush1.msra.mxu0 %v33
  %96 = vmatprep.subr.mxu0 0.0
  %97 = vmatpush1.msra.mxu0 %v34
  %98 = vmatprep.subr.mxu0 0.0
  %99 = vmatpush1.msra.mxu0 %v35
  %100 = vmatprep.subr.mxu0 0.0
  %101 = vmatpush1.msra.mxu0 0.0
  %102 = vmatprep.subr.mxu0 0.0
  %103 = vmatpush1.msra.mxu0 0.0
  %104 = vmatprep.subr.mxu0 0.0
  %105 = vmatpush1.msra.mxu0 0.0
  %106 = vmatprep.subr.mxu0 0.0
  %107 = vmatpush1.msra.mxu0 0.0
  %108 = vmatprep.subr.mxu0 0.0
  %109 = vmatpush1.msra.mxu0 0.0
  %110 = vmatprep.subr.mxu0 0.0
  %111 = vmatpush1.msra.mxu0 0.0
  %112 = vmatprep.subr.mxu0 0.0
  %113 = vmatpush1.msra.mxu0 0.0
  %114 = vmatprep.subr.mxu0 0.0
  %115 = vmatpush1.msra.mxu0 0.0
  %116 = vmatprep.subr.mxu0 0.0
  %117 = vmatpush1.msra.mxu0 0.0
  %118 = vmatprep.subr.mxu0 0.0
  %119 = vmatpush1.msra.mxu0 0.0
  %120 = vmatprep.subr.mxu0 0.0
  %121 = vmatpush1.msra.mxu0 0.0
  %122 = vmatprep.subr.mxu0 0.0
  %123 = vmatpush1.msra.mxu0 0.0
  %124 = vmatprep.subr.mxu0 0.0
  %125 = vmatpush1.msra.mxu0 0.0
  %126 = vmatprep.subr.mxu0 0.0
  %127 = vmatpush1.msra.mxu0 0.0
  %128 = vmatprep.subr.mxu0 0.0
  %129 = vmatpush1.msra.mxu0 0.0
  %130 = vmatprep.subr.mxu0 0.0
  %131 = vmatpush1.msra.mxu0 0.0
  %132 = vmatprep.subr.mxu0 0.0
  %133 = vmatpush1.msra.mxu0 0.0
  %134 = vmatprep.subr.mxu0 0.0
  %135 = vmatpush1.msra.mxu0 0.0
  %136 = vmatprep.subr.mxu0 0.0
  %137 = vmatpush1.msra.mxu0 0.0
  %138 = vmatprep.subr.mxu0 0.0
  %139 = vmatpush1.msra.mxu0 0.0
  %140 = vmatprep.subr.mxu0 0.0
  %141 = vmatpush1.msra.mxu0 0.0
  %142 = vmatprep.subr.mxu0 0.0
  %143 = vmatpush1.msra.mxu0 0.0
  %144 = vmatprep.subr.mxu0 0.0
  %145 = vmatpush1.msra.mxu0 0.0
  %146 = vmatprep.subr.mxu0 0.0
  %147 = vmatpush1.msra.mxu0 0.0
  %148 = vmatprep.subr.mxu0 0.0
  %149 = vmatpush1.msra.mxu0 0.0
  %150 = vmatprep.subr.mxu0 0.0
  %151 = vmatpush1.msra.mxu0 0.0
  %152 = vmatprep.subr.mxu0 0.0
  %153 = vmatpush1.msra.mxu0 0.0
  %154 = vmatprep.subr.mxu0 0.0
  %155 = vmatpush1.msra.mxu0 0.0
  %156 = vmatprep.mubr.f32.mxu0 0.0
  %157 = vmatmul.mubr.f32.gmra.mrb[0].mxu0 %v45
  %v158 = vpop.f32.mrb[0].mxu0
  %v159 = vadd.f32 %v41, %v158
  %v160 = vpop.f32.mrb[0].mxu0
  %161 = vmatprep.mubr.f32.mxu0 0.0
  %162 = vmatmul.mubr.f32.gmra.mrb[0].mxu0 %v48
  %v163 = vpop.f32.mrb[0].mxu0
  %v164 = vadd.f32 %v41, %v163
  %v165 = vpop.f32.mrb[0].mxu0
  %166 = vmatprep.mubr.f32.mxu0 0.0
  %167 = vmatmul.mubr.f32.gmra.mrb[0].mxu0 %v51
  %v168 = vpop.f32.mrb[0].mxu0
  %v169 = vadd.f32 %v41, %v168
  %v170 = vpop.f32.mrb[0].mxu0
  %171 = vmatprep.mubr.f32.mxu0 0.0
  %172 = vmatmul.mubr.f32.gmra.mrb[0].mxu0 %v54
  %v173 = vpop.f32.mrb[0].mxu0
  %v174 = vadd.f32 %v41, %v173
  %v175 = vpop.f32.mrb[0].mxu0
  %176 = vmatprep.mubr.f32.mxu0 0.0
  %177 = vmatmul.mubr.f32.gmra.mrb[0].mxu0 %v57
  %v178 = vpop.f32.mrb[0].mxu0
  %v179 = vadd.f32 %v41, %v178
  %v180 = vpop.f32.mrb[0].mxu0
  %181 = vmatprep.mubr.f32.mxu0 0.0
  %182 = vmatmul.mubr.f32.gmra.mrb[0].mxu0 %v60
  %v183 = vpop.f32.mrb[0].mxu0
  %v184 = vadd.f32 %v41, %v183
  %v185 = vpop.f32.mrb[0].mxu0
  %186 = vmatprep.mubr.f32.mxu0 0.0
  %187 = vmatmul.mubr.f32.gmra.mrb[0].mxu0 %v63
  %v188 = vpop.f32.mrb[0].mxu0
  %v189 = vadd.f32 %v41, %v188
  %v190 = vpop.f32.mrb[0].mxu0
  %191 = vmatprep.mubr.f32.mxu0 0.0
  %192 = vmatmul.mubr.f32.gmra.mrb[0].mxu0 %v66
  %v193 = vpop.f32.mrb[0].mxu0
  %v194 = vadd.f32 %v41, %v193
  %v195 = vpop.f32.mrb[0].mxu0
  %196 = vmatprep.mubr.f32.mxu0 0.0
  %197 = vmatmul.mubr.f32.gmra.mrb[0].mxu0 %v69
  %v198 = vpop.f32.mrb[0].mxu0
  %v199 = vadd.f32 %v41, %v198
  %v200 = vpop.f32.mrb[0].mxu0
  %201 = vmatprep.mubr.f32.mxu0 0.0
  %202 = vmatmul.mubr.f32.gmra.mrb[0].mxu0 %v72
  %v203 = vpop.f32.mrb[0].mxu0
  %v204 = vadd.f32 %v41, %v203
  %v205 = vpop.f32.mrb[0].mxu0
  %206 = vmatprep.mubr.f32.mxu0 0.0
  %207 = vmatmul.mubr.f32.gmra.mrb[0].mxu0 %v75
  %v208 = vpop.f32.mrb[0].mxu0
  %v209 = vadd.f32 %v41, %v208
  %v210 = vpop.f32.mrb[0].mxu0
  %211 = vmatprep.mubr.f32.mxu0 0.0
  %212 = vmatmul.mubr.f32.gmra.mrb[0].mxu0 %v78
  %v213 = vpop.f32.mrb[0].mxu0
  %v214 = vadd.f32 %v41, %v213
  %v215 = vpop.f32.mrb[0].mxu0
  %216 = vmatprep.mubr.f32.mxu0 0.0
  %217 = vmatmul.mubr.f32.gmra.mrb[0].mxu0 %v81
  %v218 = vpop.f32.mrb[0].mxu0
  %v219 = vadd.f32 %v41, %v218
  %v220 = vpop.f32.mrb[0].mxu0
  %221 = vmatprep.mubr.f32.mxu0 0.0
  %222 = vmatmul.mubr.f32.gmra.mrb[0].mxu0 %v84
  %v223 = vpop.f32.mrb[0].mxu0
  %v224 = vadd.f32 %v41, %v223
  %v225 = vpop.f32.mrb[0].mxu0
  %226 = vmatprep.mubr.f32.mxu0 0.0
  %227 = vmatmul.mubr.f32.gmra.mrb[0].mxu0 %v87
  %v228 = vpop.f32.mrb[0].mxu0
  %v229 = vadd.f32 %v41, %v228
  %v230 = vpop.f32.mrb[0].mxu0
  %231 = vmatprep.mubr.f32.mxu0 0.0
  %232 = vmatmul.mubr.f32.gmra.mrb[0].mxu0 %v90
  %v233 = vpop.f32.mrb[0].mxu0
  %v234 = vadd.f32 %v41, %v233
  %v235 = vpop.f32.mrb[0].mxu0
  %236 = vdwg.mxu0
  %v237 = vpack.c.bf16 %v164, %v159
  %v238 = vpack.c.bf16 %v174, %v169
  %v239 = vpack.c.bf16 %v184, %v179
  %v240 = vpack.c.bf16 %v194, %v189
  %v241 = vpack.c.bf16 %v204, %v199
  %v242 = vpack.c.bf16 %v214, %v209
  %v243 = vpack.c.bf16 %v224, %v219
  %v244 = vpack.c.bf16 %v234, %v229
  %v245 = vunpack.c.l.bf16 %v237
  %v246 = vunpack.c.h.bf16 %v237
  %v247 = vunpack.c.l.bf16 %v238
  %v248 = vunpack.c.h.bf16 %v238
  %v249 = vunpack.c.l.bf16 %v239
  %v250 = vunpack.c.h.bf16 %v239
  %v251 = vunpack.c.l.bf16 %v240
  %v252 = vunpack.c.h.bf16 %v240
  %v253 = vunpack.c.l.bf16 %v241
  %v254 = vunpack.c.h.bf16 %v241
  %v255 = vunpack.c.l.bf16 %v242
  %v256 = vunpack.c.h.bf16 %v242
  %v257 = vunpack.c.l.bf16 %v243
  %v258 = vunpack.c.h.bf16 %v243
  %v259 = vunpack.c.l.bf16 %v244
  %v260 = vunpack.c.h.bf16 %v244
  %v261 = vsub.f32 %v159, %v245
  %v262 = vsub.f32 %v164, %v246
  %v263 = vsub.f32 %v169, %v247
  %v264 = vsub.f32 %v174, %v248
  %v265 = vsub.f32 %v179, %v249
  %v266 = vsub.f32 %v184, %v250
  %v267 = vsub.f32 %v189, %v251
  %v268 = vsub.f32 %v194, %v252
  %v269 = vsub.f32 %v199, %v253
  %v270 = vsub.f32 %v204, %v254
  %v271 = vsub.f32 %v209, %v255
  %v272 = vsub.f32 %v214, %v256
  %v273 = vsub.f32 %v219, %v257
  %v274 = vsub.f32 %v224, %v258
  %v275 = vsub.f32 %v229, %v259
  %v276 = vsub.f32 %v234, %v260
  %v277 = vpack.c.bf16 %v262, %v261
  %v278 = vpack.c.bf16 %v264, %v263
  %v279 = vpack.c.bf16 %v266, %v265
  %v280 = vpack.c.bf16 %v268, %v267
  %v281 = vpack.c.bf16 %v270, %v269
  %v282 = vpack.c.bf16 %v272, %v271
  %v283 = vpack.c.bf16 %v274, %v273
  %v284 = vpack.c.bf16 %v276, %v275
  %v293 = vunpack.c.l.b16 %v237
  %v294 = vunpack.c.h.b16 %v237
  %v295 = vunpack.c.l.b16 %v238
  %v296 = vunpack.c.h.b16 %v238
  %v297 = vunpack.c.l.b16 %v239
  %v298 = vunpack.c.h.b16 %v239
  %v299 = vunpack.c.l.b16 %v240
  %v300 = vunpack.c.h.b16 %v240
  %v301 = vunpack.c.l.b16 %v241
  %v302 = vunpack.c.h.b16 %v241
  %v303 = vunpack.c.l.b16 %v242
  %v304 = vunpack.c.h.b16 %v242
  %v305 = vunpack.c.l.b16 %v243
  %v306 = vunpack.c.h.b16 %v243
  %v307 = vunpack.c.l.b16 %v244
  %v308 = vunpack.c.h.b16 %v244
  %v309 = vpack.c.b16 %v293, %v293
  %v310 = vpack.c.b16 %v294, %v294
  %v311 = vpack.c.b16 %v295, %v295
  %v312 = vpack.c.b16 %v296, %v296
  %v313 = vpack.c.b16 %v297, %v297
  %v314 = vpack.c.b16 %v298, %v298
  %v315 = vpack.c.b16 %v299, %v299
  %v316 = vpack.c.b16 %v300, %v300
  %v317 = vpack.c.b16 %v301, %v301
  %v318 = vpack.c.b16 %v302, %v302
  %v319 = vpack.c.b16 %v303, %v303
  %v320 = vpack.c.b16 %v304, %v304
  %v321 = vpack.c.b16 %v305, %v305
  %v322 = vpack.c.b16 %v306, %v306
  %v323 = vpack.c.b16 %v307, %v307
  %v324 = vpack.c.b16 %v308, %v308
  %341 = vst [vmem:[%s3] sm:$0xf] %v309
  %342 = vst [vmem:[%s3 + $0x4] sm:$0xf] %v310
  %343 = vst [vmem:[%s3 + $0x8] sm:$0xf] %v311
  %344 = vst [vmem:[%s3 + $0xc] sm:$0xf] %v312
  %345 = vst [vmem:[%s3 + $0x10] sm:$0xf] %v313
  %346 = vst [vmem:[%s3 + $0x14] sm:$0xf] %v314
  %347 = vst [vmem:[%s3 + $0x18] sm:$0xf] %v315
  %348 = vst [vmem:[%s3 + $0x1c] sm:$0xf] %v316
  %349 = vst [vmem:[%s3 + $0x20] sm:$0xf] %v317
  %350 = vst [vmem:[%s3 + $0x24] sm:$0xf] %v318
  %351 = vst [vmem:[%s3 + $0x28] sm:$0xf] %v319
  %352 = vst [vmem:[%s3 + $0x2c] sm:$0xf] %v320
  %353 = vst [vmem:[%s3 + $0x30] sm:$0xf] %v321
  %354 = vst [vmem:[%s3 + $0x34] sm:$0xf] %v322
  %355 = vst [vmem:[%s3 + $0x38] sm:$0xf] %v323
  %356 = vst [vmem:[%s3 + $0x3c] sm:$0xf] %v324
  %v365 = vunpack.c.l.b16 %v277
  %v366 = vunpack.c.h.b16 %v277
  %v367 = vunpack.c.l.b16 %v278
  %v368 = vunpack.c.h.b16 %v278
  %v369 = vunpack.c.l.b16 %v279
  %v370 = vunpack.c.h.b16 %v279
  %v371 = vunpack.c.l.b16 %v280
  %v372 = vunpack.c.h.b16 %v280
  %v373 = vunpack.c.l.b16 %v281
  %v374 = vunpack.c.h.b16 %v281
  %v375 = vunpack.c.l.b16 %v282
  %v376 = vunpack.c.h.b16 %v282
  %v377 = vunpack.c.l.b16 %v283
  %v378 = vunpack.c.h.b16 %v283
  %v379 = vunpack.c.l.b16 %v284
  %v380 = vunpack.c.h.b16 %v284
  %v381 = vpack.c.b16 %v365, %v365
  %v382 = vpack.c.b16 %v366, %v366
  %v383 = vpack.c.b16 %v367, %v367
  %v384 = vpack.c.b16 %v368, %v368
  %v385 = vpack.c.b16 %v369, %v369
  %v386 = vpack.c.b16 %v370, %v370
  %v387 = vpack.c.b16 %v371, %v371
  %v388 = vpack.c.b16 %v372, %v372
  %v389 = vpack.c.b16 %v373, %v373
  %v390 = vpack.c.b16 %v374, %v374
  %v391 = vpack.c.b16 %v375, %v375
  %v392 = vpack.c.b16 %v376, %v376
  %v393 = vpack.c.b16 %v377, %v377
  %v394 = vpack.c.b16 %v378, %v378
  %v395 = vpack.c.b16 %v379, %v379
  %v396 = vpack.c.b16 %v380, %v380
  %413 = vst [vmem:[%s4] sm:$0xf] %v381
  %414 = vst [vmem:[%s4 + $0x4] sm:$0xf] %v382
  %415 = vst [vmem:[%s4 + $0x8] sm:$0xf] %v383
  %416 = vst [vmem:[%s4 + $0xc] sm:$0xf] %v384
  %417 = vst [vmem:[%s4 + $0x10] sm:$0xf] %v385
  %418 = vst [vmem:[%s4 + $0x14] sm:$0xf] %v386
  %419 = vst [vmem:[%s4 + $0x18] sm:$0xf] %v387
  %420 = vst [vmem:[%s4 + $0x1c] sm:$0xf] %v388
  %421 = vst [vmem:[%s4 + $0x20] sm:$0xf] %v389
  %422 = vst [vmem:[%s4 + $0x24] sm:$0xf] %v390
  %423 = vst [vmem:[%s4 + $0x28] sm:$0xf] %v391
  %424 = vst [vmem:[%s4 + $0x2c] sm:$0xf] %v392
  %425 = vst [vmem:[%s4 + $0x30] sm:$0xf] %v393
  %426 = vst [vmem:[%s4 + $0x34] sm:$0xf] %v394
  %427 = vst [vmem:[%s4 + $0x38] sm:$0xf] %v395
  %428 = vst [vmem:[%s4 + $0x3c] sm:$0xf] %v396
  // Predicated region
  $region14: #{_forward.2} parent=0 // pred_check
    _
  $region15: #{_forward.2} parent=0 // pred_check_branch
    %430 = sbr.rel (0) target = $region17
  $region16: #{_forward.2} parent=0 // pred_region
    _
  $region17: #{_forward.2} parent=0 // pred_fallthru
    _
  // Predicated region
  $region18: #{_forward.2} parent=0 // pred_check
    _
  $region19: #{_forward.2} parent=0 // pred_check_branch
    %432 = sbr.rel (0) target = $region21
  $region20: #{_forward.2} parent=0 // pred_region
    _
  $region21: #{_forward.2} parent=0 // pred_fallthru
    _
  // Predicated region
  $region22: #{_forward.2} parent=0 // pred_check
    _
  $region23: #{_forward.2} parent=0 // pred_check_branch
    %434 = sbr.rel (0) target = $region25
  $region24: #{_forward.2} parent=0 // pred_region
    _
  $region25: #{_forward.2} parent=0 // pred_fallthru
    _
  // Predicated region
  $region26: #{_forward.2} parent=0 // pred_check
    _
  $region27: #{_forward.2} parent=0 // pred_check_branch
    %436 = sbr.rel (0) target = $region29
  $region28: #{_forward.2} parent=0 // pred_region
    _
  $region29: #{_forward.2} parent=0 // pred_fallthru
    _

// kernel: _forward.3
$region0: #{_forward.3}
  #allocation0 [shape = 'u32[]', space=smem, size = 0x4, offset = 0x4, fixed_abs, tag = 'smem constant byte address 0x4 - core index']
  #allocation1 [shape = 'u32[144,128]{1,0:T(1,128)}', space=vmem, size = 0x12000, scoped, tag = 'internal scratch']
  %s0 = inlined_call_operand.vmem [shape: bf16[16,128], index: 0, kind: input, shape index: {}]
  %s1 = inlined_call_operand.vmem [shape: bf16[128,128], index: 1, kind: input, shape index: {}]
  %s2 = inlined_call_operand.vmem [shape: bf16[128,128], index: 2, kind: input, shape index: {}]
  %s3 = inlined_call_operand.hbm [shape: f32[16,128], index: 3, kind: output, shape index: {}]
  %s4 = sld [smem:[#allocation0]]
  $region30: #{_forward.3} parent=0
    _
  %s6 = ssub.s32 1, %s4
  %s7 = scalar_select 0, %s6, %s4
  $region1: #{_forward.3} parent=0
    #allocation2 [shape = 'u8[8192]{0}', space=vmem, size = 0x2000, scoped, tag = 'output window, operand 0, single buffered']
    #allocation3 [shape = 's32[1]{0}', space=sflag, size = 0x4, scoped, tag = 'scoped memory for _forward.3']
    %8 = vsyncpa [#allocation3], 0
    // Predicated region
    $region2: #{_forward.3} parent=1 // pred_check
      _
    $region3: #{_forward.3} parent=1 // pred_check_branch
      %10 = sbr.rel (0) target = $region5
    $region4: #{_forward.3} parent=1 // pred_region
      _
    $region5: #{_forward.3} parent=1 // pred_fallthru
      _
    // Predicated region
    $region6: #{_forward.3} parent=1 // pred_check
      _
    $region7: #{_forward.3} parent=1 // pred_check_branch
      %12 = sbr.rel (0) target = $region9
    $region8: #{_forward.3} parent=1 // pred_region
      _
    $region9: #{_forward.3} parent=1 // pred_fallthru
      _
    // Predicated region
    $region10: #{_forward.3} parent=1 // pred_check
      _
    $region11: #{_forward.3} parent=1 // pred_check_branch
      %14 = sbr.rel (0) target = $region13
    $region12: #{_forward.3} parent=1 // pred_region
      _
    $region13: #{_forward.3} parent=1 // pred_fallthru
      _
    %p16 = scmp.eq.s32.totalorder 0, 0
    // Predicated region
    $region14: #{_forward.3} parent=1 // pred_check
      %p17 = pneg %p16
    $region15: #{_forward.3} parent=1 // pred_check_branch
      %19 = sbr.rel (%p17) target = $region17
    $region16: #{_forward.3} parent=1 // pred_region
      %20 = vst [vmem:[#allocation2] sm:$0xff] 0.0
      %21 = vst [vmem:[#allocation2 + $0x8] sm:$0xff] 0.0
    $region17: #{_forward.3} parent=1 // pred_fallthru
      _
    %v22 = vld [vmem:[%s0] sm:$0xf]
    %v23 = vld [vmem:[%s0 + $0x4] sm:$0xf]
    %s24 = smul.u32 0, 128
    %s25 = sshra.s32 %s24, 3
    %s26 = sand.u32 %s24, 7
    %s27 = smul.addr %s25, 4
    %s28 = scalar_lea.vmem %s1, %s27
    %v29 = vld [vmem:[%s28] sm:$0xf]
    %v30 = vld [vmem:[%s28 + $0x4] sm:$0xf]
    %v31 = vld [vmem:[%s28 + $0x8] sm:$0xf]
    %v32 = vld [vmem:[%s28 + $0xc] sm:$0xf]
    %v33 = vld [vmem:[%s28 + $0x10] sm:$0xf]
    %v34 = vld [vmem:[%s28 + $0x14] sm:$0xf]
    %v35 = vld [vmem:[%s28 + $0x18] sm:$0xf]
    %v36 = vld [vmem:[%s28 + $0x1c] sm:$0xf]
    %v37 = vld [vmem:[%s28 + $0x20] sm:$0xf]
    %v38 = vld [vmem:[%s28 + $0x24] sm:$0xf]
    %v39 = vld [vmem:[%s28 + $0x28] sm:$0xf]
    %v40 = vld [vmem:[%s28 + $0x2c] sm:$0xf]
    %v41 = vld [vmem:[%s28 + $0x30] sm:$0xf]
    %v42 = vld [vmem:[%s28 + $0x34] sm:$0xf]
    %v43 = vld [vmem:[%s28 + $0x38] sm:$0xf]
    %v44 = vld [vmem:[%s28 + $0x3c] sm:$0xf]
    %s45 = smul.addr %s25, 4
    %s46 = scalar_lea.vmem %s2, %s45
    %v47 = vld [vmem:[%s46] sm:$0xf]
    %v48 = vld [vmem:[%s46 + $0x4] sm:$0xf]
    %v49 = vld [vmem:[%s46 + $0x8] sm:$0xf]
    %v50 = vld [vmem:[%s46 + $0xc] sm:$0xf]
    %v51 = vld [vmem:[%s46 + $0x10] sm:$0xf]
    %v52 = vld [vmem:[%s46 + $0x14] sm:$0xf]
    %v53 = vld [vmem:[%s46 + $0x18] sm:$0xf]
    %v54 = vld [vmem:[%s46 + $0x1c] sm:$0xf]
    %v55 = vld [vmem:[%s46 + $0x20] sm:$0xf]
    %v56 = vld [vmem:[%s46 + $0x24] sm:$0xf]
    %v57 = vld [vmem:[%s46 + $0x28] sm:$0xf]
    %v58 = vld [vmem:[%s46 + $0x2c] sm:$0xf]
    %v59 = vld [vmem:[%s46 + $0x30] sm:$0xf]
    %v60 = vld [vmem:[%s46 + $0x34] sm:$0xf]
    %v61 = vld [vmem:[%s46 + $0x38] sm:$0xf]
    %v62 = vld [vmem:[%s46 + $0x3c] sm:$0xf]
    %v63 = vld [vmem:[#allocation2] sm:$0xff]
    %v64 = vld [vmem:[#allocation2 + $0x8] sm:$0xff]
    %v67 = vunpack.c.l.b16 %v22
    %v68 = vunpack.c.l.b16 %v23
    %v69 = vpack.c.b16 %v68, %v67
    %v87 = vunpack.c.l.b16 %v47
    %v88 = vunpack.c.l.b16 %v48
    %v89 = vunpack.c.l.b16 %v49
    %v90 = vunpack.c.l.b16 %v50
    %v91 = vunpack.c.l.b16 %v51
    %v92 = vunpack.c.l.b16 %v52
    %v93 = vunpack.c.l.b16 %v53
    %v94 = vunpack.c.l.b16 %v54
    %v95 = vunpack.c.l.b16 %v55
    %v96 = vunpack.c.l.b16 %v56
    %v97 = vunpack.c.l.b16 %v57
    %v98 = vunpack.c.l.b16 %v58
    %v99 = vunpack.c.l.b16 %v59
    %v100 = vunpack.c.l.b16 %v60
    %v101 = vunpack.c.l.b16 %v61
    %v102 = vunpack.c.l.b16 %v62
    %v103 = vpack.c.b16 %v88, %v87
    %v104 = vpack.c.b16 %v90, %v89
    %v105 = vpack.c.b16 %v92, %v91
    %v106 = vpack.c.b16 %v94, %v93
    %v107 = vpack.c.b16 %v96, %v95
    %v108 = vpack.c.b16 %v98, %v97
    %v109 = vpack.c.b16 %v100, %v99
    %v110 = vpack.c.b16 %v102, %v101
    %119 = vmatprep.subr.bf16.mxu0 0
    %120 = vmatpush1.bf16.msra.mxu0 %v103
    %121 = vmatprep.subr.bf16.mxu0 0
    %122 = vmatpush1.bf16.msra.mxu0 %v104
    %123 = vmatprep.subr.bf16.mxu0 0
    %124 = vmatpush1.bf16.msra.mxu0 %v105
    %125 = vmatprep.subr.bf16.mxu0 0
    %126 = vmatpush1.bf16.msra.mxu0 %v106
    %127 = vmatprep.subr.bf16.mxu0 0
    %128 = vmatpush1.bf16.msra.mxu0 %v107
    %129 = vmatprep.subr.bf16.mxu0 0
    %130 = vmatpush1.bf16.msra.mxu0 %v108
    %131 = vmatprep.subr.bf16.mxu0 0
    %132 = vmatpush1.bf16.msra.mxu0 %v109
    %133 = vmatprep.subr.bf16.mxu0 0
    %134 = vmatpush1.bf16.msra.mxu0 %v110
    %135 = vmatprep.subr.bf16.mxu0 0
    %136 = vmatpush1.bf16.msra.mxu0 0
    %137 = vmatprep.subr.bf16.mxu0 0
    %138 = vmatpush1.bf16.msra.mxu0 0
    %139 = vmatprep.subr.bf16.mxu0 0
    %140 = vmatpush1.bf16.msra.mxu0 0
    %141 = vmatprep.subr.bf16.mxu0 0
    %142 = vmatpush1.bf16.msra.mxu0 0
    %143 = vmatprep.subr.bf16.mxu0 0
    %144 = vmatpush1.bf16.msra.mxu0 0
    %145 = vmatprep.subr.bf16.mxu0 0
    %146 = vmatpush1.bf16.msra.mxu0 0
    %147 = vmatprep.subr.bf16.mxu0 0
    %148 = vmatpush1.bf16.msra.mxu0 0
    %149 = vmatprep.subr.bf16.mxu0 0
    %150 = vmatpush1.bf16.msra.mxu0 0
    %151 = vmatprep.mubr.bf16.mxu0 0
    %152 = vmatmul.mubr.bf16.gmra.mrb[0].mxu0 %v69
    %v153 = vpop.f32.mrb[0].mxu0
    %v154 = vadd.f32 0.0, %v153
    %v155 = vpop.f32.mrb[0].mxu0
    %v156 = vpop.f32.mrb[0].mxu0
    %v157 = vadd.f32 0.0, %v156
    %v158 = vpop.f32.mrb[0].mxu0
    %159 = vdwg.mxu0
    %v176 = vunpack.c.l.b16 %v29
    %v177 = vunpack.c.l.b16 %v30
    %v178 = vunpack.c.l.b16 %v31
    %v179 = vunpack.c.l.b16 %v32
    %v180 = vunpack.c.l.b16 %v33
    %v181 = vunpack.c.l.b16 %v34
    %v182 = vunpack.c.l.b16 %v35
    %v183 = vunpack.c.l.b16 %v36
    %v184 = vunpack.c.l.b16 %v37
    %v185 = vunpack.c.l.b16 %v38
    %v186 = vunpack.c.l.b16 %v39
    %v187 = vunpack.c.l.b16 %v40
    %v188 = vunpack.c.l.b16 %v41
    %v189 = vunpack.c.l.b16 %v42
    %v190 = vunpack.c.l.b16 %v43
    %v191 = vunpack.c.l.b16 %v44
    %v192 = vpack.c.b16 %v177, %v176
    %v193 = vpack.c.b16 %v179, %v178
    %v194 = vpack.c.b16 %v181, %v180
    %v195 = vpack.c.b16 %v183, %v182
    %v196 = vpack.c.b16 %v185, %v184
    %v197 = vpack.c.b16 %v187, %v186
    %v198 = vpack.c.b16 %v189, %v188
    %v199 = vpack.c.b16 %v191, %v190
    %208 = vmatprep.subr.bf16.mxu0 0
    %209 = vmatpush1.bf16.msra.mxu0 %v192
    %210 = vmatprep.subr.bf16.mxu0 0
    %211 = vmatpush1.bf16.msra.mxu0 %v193
    %212 = vmatprep.subr.bf16.mxu0 0
    %213 = vmatpush1.bf16.msra.mxu0 %v194
    %214 = vmatprep.subr.bf16.mxu0 0
    %215 = vmatpush1.bf16.msra.mxu0 %v195
    %216 = vmatprep.subr.bf16.mxu0 0
    %217 = vmatpush1.bf16.msra.mxu0 %v196
    %218 = vmatprep.subr.bf16.mxu0 0
    %219 = vmatpush1.bf16.msra.mxu0 %v197
    %220 = vmatprep.subr.bf16.mxu0 0
    %221 = vmatpush1.bf16.msra.mxu0 %v198
    %222 = vmatprep.subr.bf16.mxu0 0
    %223 = vmatpush1.bf16.msra.mxu0 %v199
    %224 = vmatprep.subr.bf16.mxu0 0
    %225 = vmatpush1.bf16.msra.mxu0 0
    %226 = vmatprep.subr.bf16.mxu0 0
    %227 = vmatpush1.bf16.msra.mxu0 0
    %228 = vmatprep.subr.bf16.mxu0 0
    %229 = vmatpush1.bf16.msra.mxu0 0
    %230 = vmatprep.subr.bf16.mxu0 0
    %231 = vmatpush1.bf16.msra.mxu0 0
    %232 = vmatprep.subr.bf16.mxu0 0
    %233 = vmatpush1.bf16.msra.mxu0 0
    %234 = vmatprep.subr.bf16.mxu0 0
    %235 = vmatpush1.bf16.msra.mxu0 0
    %236 = vmatprep.subr.bf16.mxu0 0
    %237 = vmatpush1.bf16.msra.mxu0 0
    %238 = vmatprep.subr.bf16.mxu0 0
    %239 = vmatpush1.bf16.msra.mxu0 0
    %240 = vmatprep.mubr.bf16.mxu0 0
    %241 = vmatmul.mubr.bf16.gmra.mrb[0].mxu0 %v69
    %v242 = vpop.f32.mrb[0].mxu0
    %v243 = vadd.f32 %v154, %v242
    %v244 = vpop.f32.mrb[0].mxu0
    %v245 = vpop.f32.mrb[0].mxu0
    %v246 = vadd.f32 %v157, %v245
    %v247 = vpop.f32.mrb[0].mxu0
    %248 = vdwg.mxu0
    %v249 = vadd.f32 %v63, %v243
    %v250 = vadd.f32 %v64, %v246
    %251 = vst [vmem:[#allocation2] sm:$0xff] %v249
    %252 = vst [vmem:[#allocation2 + $0x8] sm:$0xff] %v250
    // Predicated region
    $region18: #{_forward.3} parent=1 // pred_check
      %p253 = pneg %p16
    $region19: #{_forward.3} parent=1 // pred_check_branch
      %255 = sbr.rel (%p253) target = $region21
    $region20: #{_forward.3} parent=1 // pred_region
      %v256 = vld [vmem:[#allocation2] sm:$0xff]
      %v257 = vld [vmem:[#allocation2 + $0x8] sm:$0xff]
      %v258 = vlaneseq
      %v259 = vand.u32 %v258, 127
      %vm260 = vcmp.eq.s32.totalorder %v259, 32
      %v261 = vsel %vm260, %v256, 0.0
      %v262 = vsel %vm260, %v257, 0.0
      %263 = vadd.xlane.f32.xlu0 %v261
      %v264 = vpop.xlane.xlu0 %263
      %265 = vadd.xlane.f32.xlu0 %v262
      %v266 = vpop.xlane.xlu0 %265
      %vm267 = vcmp.gt.f32.partialorder %v264, 0.0
      %vm268 = vcmp.gt.f32.partialorder %v266, 0.0
      %v269 = vrcp.pop %v264
      %v270 = vmul.f32 1.0, %v269
      %v271 = vrcp.pop %v266
      %v272 = vmul.f32 1.0, %v271
      %v273 = vsel %vm267, %v270, 0.0
      %v274 = vsel %vm268, %v272, 0.0
      %v275 = vmul.f32 %v256, %v273
      %v276 = vmul.f32 %v257, %v274
      %277 = vst [vmem:[#allocation2] sm:$0xff] %v275
      %278 = vst [vmem:[#allocation2 + $0x8] sm:$0xff] %v276
    $region21: #{_forward.3} parent=1 // pred_fallthru
      _
    // Predicated region
    $region22: #{_forward.3} parent=1 // pred_check
      _
    $region23: #{_forward.3} parent=1 // pred_check_branch
      %280 = sbr.rel (0) target = $region25
    $region24: #{_forward.3} parent=1 // pred_region
      %s282 = ssub.s32 256, 256
      %283 = vsyncadd [#allocation3], %s282
      %s284 = sshll.u32 [#allocation2], 4
      %s285 = int_to_ptr.vmem [resolvable:$true] %s284
      %290 = dma.vmem_to_hbm [thread:$0]  %s285, 256, %s3, [#allocation3], 128, 128, 8
    $region25: #{_forward.3} parent=1 // pred_fallthru
      _
    // Predicated region
    $region26: #{_forward.3} parent=1 // pred_check
      _
    $region27: #{_forward.3} parent=1 // pred_check_branch
      %292 = sbr.rel (0) target = $region29
    $region28: #{_forward.3} parent=1 // pred_region
      %293 = dma.done [#allocation3], 256
    $region29: #{_forward.3} parent=1 // pred_fallthru
      _
    %294 = vsyncpa [#allocation3], 1

</llo_original>
